<compile_context>
chip_gen: v7x
topology: tpu7x:2x2x1
jax: 0.10.0
libtpu: 0.0.40
codegen_flags: <defaults>
</compile_context>

<pallas_src>
import functools

import jax
import jax.numpy as jnp
from jax.experimental import pallas as pl
from jax.experimental.pallas import tpu as pltpu

HIDDEN = 256
_SQRT_HALF = 0.7071067811865476


def actor_kernel(x_ref, w1_ref, b1_ref, w2_ref, b2_ref, w3_ref, b3_ref,
                 w5row_ref, b5_ref, o_ref, *, mxu_dtype, approximate_gelu):
    def act(v):
        if approximate_gelu:
            # tanh-based GELU -> EUP slot (otherwise idle); frees the VALU.
            return jax.nn.gelu(v, approximate=True)
        # Exact erf GELU (PyTorch nn.GELU default); long VALU polynomial.
        return 0.5 * v * (1.0 + jax.lax.erf(v * jnp.float32(_SQRT_HALF)))

    def dense(h, w_ref, b_ref):
        # MXU matmul with bf16 (native MXU dtype) inputs, f32 accumulation.
        return jnp.dot(h.astype(mxu_dtype), w_ref[...],
                       preferred_element_type=jnp.float32) + b_ref[...]

    h = act(dense(x_ref[...], w1_ref, b1_ref))
    h = act(dense(h, w2_ref, b2_ref))
    h = act(dense(h, w3_ref, b3_ref))
    # fc5 (HIDDEN -> 1): VPU multiply + lane reduce in f32 instead of an N=1
    # MXU matmul.
    o_ref[...] = jnp.sum(h * w5row_ref[...], axis=-1, keepdims=True) + b5_ref[...]


def _round_up(n, m):
    return ((n + m - 1) // m) * m


def _choose_tile_b(batch, tile_b_cap):
    """Batch tile: multiple of 8, <= cap, targeting an even grid length so the
    'parallel' batch axis splits evenly across v7x's two TensorCores."""
    cap = max(8, _round_up(int(tile_b_cap), 8))
    if batch <= 8:
        return 8
    steps = max(2, pl.cdiv(batch, cap))
    if steps % 2:
        steps += 1
    return min(cap, max(8, _round_up(pl.cdiv(batch, steps), 8)))


def actor_forward(x, params, *, tile_b=256, mxu_dtype=jnp.bfloat16,
                  approximate_gelu=True):
    """x: (B, state_dim + 3) float32 -> logit (B, 1) float32."""
    w1, b1, w2, b2, w3, b3, w5, b5 = params
    B, D = x.shape

    # Pre-cast the matmul weights to the MXU input dtype once here (~260 KiB
    # total) so the kernel DMAs half the weight bytes and skips per-grid-step
    # casts; x/h are cast inside the kernel.  Biases + fc5 row stay f32.
    w1m = w1.astype(mxu_dtype)
    w2m = w2.astype(mxu_dtype)
    w3m = w3.astype(mxu_dtype)
    w5row = w5.reshape(1, HIDDEN).astype(jnp.float32)

    tb = _choose_tile_b(B, tile_b)
    grid = (pl.cdiv(B, tb),)   # partial last block handled by Pallas (no wrapper pad)

    const2d = lambda shape: pl.BlockSpec(shape, lambda i: (0, 0))

    kernel = functools.partial(actor_kernel, mxu_dtype=mxu_dtype,
                               approximate_gelu=approximate_gelu)

    return pl.pallas_call(
        kernel,
        out_shape=jax.ShapeDtypeStruct((B, 1), jnp.float32),
        grid=grid,
        in_specs=[
            pl.BlockSpec((tb, D), lambda i: (i, 0)),          # x tile moves with grid
            const2d((D, HIDDEN)), const2d((1, HIDDEN)),       # fc1 (VMEM-resident)
            const2d((HIDDEN, HIDDEN)), const2d((1, HIDDEN)),  # fc2 (VMEM-resident)
            const2d((HIDDEN, HIDDEN)), const2d((1, HIDDEN)),  # fc3 (VMEM-resident)
            const2d((1, HIDDEN)), const2d((1, 1)),            # fc5 row + bias
        ],
        out_specs=pl.BlockSpec((tb, 1), lambda i: (i, 0)),
        compiler_params=pltpu.CompilerParams(
            dimension_semantics=("parallel",)),
    )(x, w1m, b1, w2m, b2, w3m, b3, w5row, b5)


def init_actor_params(state_dim):
    """Matches Actor._init_weights: all Linear weights and biases = -1e-5."""
    input_dim = state_dim + 3
    c = jnp.float32(-1e-5)
    w1 = jnp.full((input_dim, HIDDEN), c, jnp.float32)
    b1 = jnp.full((1, HIDDEN), c, jnp.float32)
    w2 = jnp.full((HIDDEN, HIDDEN), c, jnp.float32)
    b2 = jnp.full((1, HIDDEN), c, jnp.float32)
    w3 = jnp.full((HIDDEN, HIDDEN), c, jnp.float32)
    b3 = jnp.full((1, HIDDEN), c, jnp.float32)
    w5 = jnp.full((HIDDEN, 1), c, jnp.float32)
    b5 = jnp.full((1, 1), c, jnp.float32)
    return (w1, b1, w2, b2, w3, b3, w5, b5)


def random_actor_params(key, state_dim):
    """Random params (for a meaningful numerical check of the kernel math)."""
    input_dim = state_dim + 3
    ks = jax.random.split(key, 8)
    scale = 0.05
    w1 = scale * jax.random.normal(ks[0], (input_dim, HIDDEN), jnp.float32)
    b1 = scale * jax.random.normal(ks[1], (1, HIDDEN), jnp.float32)
    w2 = scale * jax.random.normal(ks[2], (HIDDEN, HIDDEN), jnp.float32)
    b2 = scale * jax.random.normal(ks[3], (1, HIDDEN), jnp.float32)
    w3 = scale * jax.random.normal(ks[4], (HIDDEN, HIDDEN), jnp.float32)
    b3 = scale * jax.random.normal(ks[5], (1, HIDDEN), jnp.float32)
    w5 = scale * jax.random.normal(ks[6], (HIDDEN, 1), jnp.float32)
    b5 = scale * jax.random.normal(ks[7], (1, 1), jnp.float32)
    return (w1, b1, w2, b2, w3, b3, w5, b5)


def actor_forward_ref(x, params):
    """Pure-f32, exact-erf reference == PyTorch module semantics."""
    w1, b1, w2, b2, w3, b3, w5, b5 = params
    g = lambda v: jax.nn.gelu(v, approximate=False)
    h = g(x @ w1 + b1)
    h = g(h @ w2 + b2)
    h = g(h @ w3 + b3)
    return h @ w5 + b5


def actor_forward_ref_matched(x, params, mxu_dtype=jnp.bfloat16):
    """Reference mirroring the kernel's numeric choices (bf16 MXU inputs,
    f32 accumulation, tanh GELU, f32 fc5 reduce)."""
    w1, b1, w2, b2, w3, b3, w5, b5 = params
    g = lambda v: jax.nn.gelu(v, approximate=True)
    dense = lambda h, w, b: jnp.dot(h.astype(mxu_dtype), w.astype(mxu_dtype),
                                    preferred_element_type=jnp.float32) + b
    h = g(dense(x, w1, b1))
    h = g(dense(h, w2, b2))
    h = g(dense(h, w3, b3))
    return jnp.sum(h * w5.reshape(1, HIDDEN), axis=-1, keepdims=True) + b5


if __name__ == "__main__":
    state_dim = 5                       # input_dim = state_dim + 3 = 8
    key = jax.random.PRNGKey(0)
    kx1, kx2, kp = jax.random.split(key, 3)

    # 1) Module-faithful check: constant-init (-1e-5) params, tiny batch (B=2),
    #    against the exact-erf pure-f32 reference (PyTorch semantics).
    batch = 2
    x_small = jax.random.normal(kx1, (batch, state_dim + 3), dtype=jnp.float32)
    params_const = init_actor_params(state_dim)
    out_small = jax.block_until_ready(actor_forward(x_small, params_const))
    ref_small = actor_forward_ref(x_small, params_const)
    assert out_small.shape == (batch, 1)
    assert jnp.allclose(out_small, ref_small, atol=1e-5, rtol=1e-4), (
        out_small, ref_small)

    # 2) Tiling / remainder / megacore-balance check: random params, B=300
    #    -> grid of 2 balanced tiles (152 + 148 rows), last block partial.
    batch_big = 300
    x_big = jax.random.normal(kx2, (batch_big, state_dim + 3), dtype=jnp.float32)
    params_rand = random_actor_params(kp, state_dim)
    out_big = jax.block_until_ready(actor_forward(x_big, params_rand, tile_b=256))
    assert out_big.shape == (batch_big, 1)
    # Tight check vs a reference with the same numeric choices.
    ref_matched = actor_forward_ref_matched(x_big, params_rand)
    assert jnp.allclose(out_big, ref_matched, atol=2e-4, rtol=2e-4), (
        float(jnp.max(jnp.abs(out_big - ref_matched))))
    # Loose check vs the exact-GELU pure-f32 module semantics.
    ref_exact = actor_forward_ref(x_big, params_rand)
    assert jnp.allclose(out_big, ref_exact, atol=2e-2, rtol=2e-2), (
        float(jnp.max(jnp.abs(out_big - ref_exact))))

    print("KERNEL_OK")
</pallas_src>

<mosaic_0001>
module attributes {stable_mosaic.version = 11 : i64} {
  func.func @actor_kernel(%arg0: i32, %arg1: memref<8x8xf32, #tpu.memory_space<vmem>>, %arg2: memref<8x256xbf16, #tpu.memory_space<vmem>>, %arg3: memref<1x256xf32, #tpu.memory_space<vmem>>, %arg4: memref<256x256xbf16, #tpu.memory_space<vmem>>, %arg5: memref<1x256xf32, #tpu.memory_space<vmem>>, %arg6: memref<256x256xbf16, #tpu.memory_space<vmem>>, %arg7: memref<1x256xf32, #tpu.memory_space<vmem>>, %arg8: memref<1x256xf32, #tpu.memory_space<vmem>>, %arg9: memref<1x1xf32, #tpu.memory_space<vmem>>, %arg10: memref<8x1xf32, #tpu.memory_space<vmem>>) attributes {dimension_semantics = [#tpu.dimension_semantics<parallel>], iteration_bounds = array<i64: 1>, scalar_prefetch = 0 : i64, scratch_operands = 0 : i64, tpu.core_type = #tpu.core_type<tc>, window_params = [{transform_indices = @transform_0, window_bounds = array<i64: 8, 8>}, {pipeline_mode = #tpu.pipeline_mode<synchronous>, transform_indices = @transform_1, window_bounds = array<i64: 8, 256>}, {pipeline_mode = #tpu.pipeline_mode<synchronous>, transform_indices = @transform_2, window_bounds = array<i64: 1, 256>}, {pipeline_mode = #tpu.pipeline_mode<synchronous>, transform_indices = @transform_3, window_bounds = array<i64: 256, 256>}, {pipeline_mode = #tpu.pipeline_mode<synchronous>, transform_indices = @transform_4, window_bounds = array<i64: 1, 256>}, {pipeline_mode = #tpu.pipeline_mode<synchronous>, transform_indices = @transform_5, window_bounds = array<i64: 256, 256>}, {pipeline_mode = #tpu.pipeline_mode<synchronous>, transform_indices = @transform_6, window_bounds = array<i64: 1, 256>}, {pipeline_mode = #tpu.pipeline_mode<synchronous>, transform_indices = @transform_7, window_bounds = array<i64: 1, 256>}, {pipeline_mode = #tpu.pipeline_mode<synchronous>, transform_indices = @transform_8, window_bounds = array<i64: 1, 1>}, {transform_indices = @transform_9, window_bounds = array<i64: 8, 1>}]} {
    %c0 = arith.constant 0 : index
    %c0_0 = arith.constant 0 : index
    %0 = vector.load %arg1[%c0, %c0_0] : memref<8x8xf32, #tpu.memory_space<vmem>>, vector<8x8xf32>
    %1 = arith.truncf %0 : vector<8x8xf32> to vector<8x8xbf16>
    %c0_1 = arith.constant 0 : index
    %c0_2 = arith.constant 0 : index
    %2 = vector.load %arg2[%c0_1, %c0_2] : memref<8x256xbf16, #tpu.memory_space<vmem>>, vector<8x256xbf16>
    %cst = arith.constant dense<0.000000e+00> : vector<8x256xf32>
    %3 = tpu.matmul %1, %2, %cst {dimension_numbers = #tpu.dot_dimension_numbers<[1], [0], [0], [1], [0, 0, 1, 1], [], []>} : vector<8x8xbf16>, vector<8x256xbf16>, vector<8x256xf32> -> vector<8x256xf32>
    %c0_3 = arith.constant 0 : index
    %c0_4 = arith.constant 0 : index
    %4 = vector.load %arg3[%c0_3, %c0_4] : memref<1x256xf32, #tpu.memory_space<vmem>>, vector<1x256xf32>
    %5 = vector.broadcast %4 : vector<1x256xf32> to vector<8x256xf32>
    %6 = arith.addf %3, %5 : vector<8x256xf32>
    %7 = arith.mulf %6, %6 : vector<8x256xf32>
    %8 = arith.mulf %6, %7 : vector<8x256xf32>
    %cst_5 = arith.constant 4.471500e-02 : f32
    %9 = vector.broadcast %cst_5 : f32 to vector<8x256xf32>
    %10 = arith.mulf %9, %8 : vector<8x256xf32>
    %11 = arith.addf %6, %10 : vector<8x256xf32>
    %cst_6 = arith.constant 0.797884583 : f32
    %12 = vector.broadcast %cst_6 : f32 to vector<8x256xf32>
    %13 = arith.mulf %12, %11 : vector<8x256xf32>
    %14 = math.tanh %13 : vector<8x256xf32>
    %cst_7 = arith.constant 1.000000e+00 : f32
    %15 = vector.broadcast %cst_7 : f32 to vector<8x256xf32>
    %16 = arith.addf %15, %14 : vector<8x256xf32>
    %cst_8 = arith.constant 5.000000e-01 : f32
    %17 = vector.broadcast %cst_8 : f32 to vector<8x256xf32>
    %18 = arith.mulf %17, %16 : vector<8x256xf32>
    %19 = arith.mulf %6, %18 : vector<8x256xf32>
    %20 = arith.truncf %19 : vector<8x256xf32> to vector<8x256xbf16>
    %c0_9 = arith.constant 0 : index
    %c0_10 = arith.constant 0 : index
    %21 = vector.load %arg4[%c0_9, %c0_10] : memref<256x256xbf16, #tpu.memory_space<vmem>>, vector<256x256xbf16>
    %cst_11 = arith.constant dense<0.000000e+00> : vector<8x256xf32>
    %22 = tpu.matmul %20, %21, %cst_11 {dimension_numbers = #tpu.dot_dimension_numbers<[1], [0], [0], [1], [0, 0, 1, 1], [], []>} : vector<8x256xbf16>, vector<256x256xbf16>, vector<8x256xf32> -> vector<8x256xf32>
    %c0_12 = arith.constant 0 : index
    %c0_13 = arith.constant 0 : index
    %23 = vector.load %arg5[%c0_12, %c0_13] : memref<1x256xf32, #tpu.memory_space<vmem>>, vector<1x256xf32>
    %24 = vector.broadcast %23 : vector<1x256xf32> to vector<8x256xf32>
    %25 = arith.addf %22, %24 : vector<8x256xf32>
    %26 = arith.mulf %25, %25 : vector<8x256xf32>
    %27 = arith.mulf %25, %26 : vector<8x256xf32>
    %cst_14 = arith.constant 4.471500e-02 : f32
    %28 = vector.broadcast %cst_14 : f32 to vector<8x256xf32>
    %29 = arith.mulf %28, %27 : vector<8x256xf32>
    %30 = arith.addf %25, %29 : vector<8x256xf32>
    %cst_15 = arith.constant 0.797884583 : f32
    %31 = vector.broadcast %cst_15 : f32 to vector<8x256xf32>
    %32 = arith.mulf %31, %30 : vector<8x256xf32>
    %33 = math.tanh %32 : vector<8x256xf32>
    %cst_16 = arith.constant 1.000000e+00 : f32
    %34 = vector.broadcast %cst_16 : f32 to vector<8x256xf32>
    %35 = arith.addf %34, %33 : vector<8x256xf32>
    %cst_17 = arith.constant 5.000000e-01 : f32
    %36 = vector.broadcast %cst_17 : f32 to vector<8x256xf32>
    %37 = arith.mulf %36, %35 : vector<8x256xf32>
    %38 = arith.mulf %25, %37 : vector<8x256xf32>
    %39 = arith.truncf %38 : vector<8x256xf32> to vector<8x256xbf16>
    %c0_18 = arith.constant 0 : index
    %c0_19 = arith.constant 0 : index
    %40 = vector.load %arg6[%c0_18, %c0_19] : memref<256x256xbf16, #tpu.memory_space<vmem>>, vector<256x256xbf16>
    %cst_20 = arith.constant dense<0.000000e+00> : vector<8x256xf32>
    %41 = tpu.matmul %39, %40, %cst_20 {dimension_numbers = #tpu.dot_dimension_numbers<[1], [0], [0], [1], [0, 0, 1, 1], [], []>} : vector<8x256xbf16>, vector<256x256xbf16>, vector<8x256xf32> -> vector<8x256xf32>
    %c0_21 = arith.constant 0 : index
    %c0_22 = arith.constant 0 : index
    %42 = vector.load %arg7[%c0_21, %c0_22] : memref<1x256xf32, #tpu.memory_space<vmem>>, vector<1x256xf32>
    %43 = vector.broadcast %42 : vector<1x256xf32> to vector<8x256xf32>
    %44 = arith.addf %41, %43 : vector<8x256xf32>
    %45 = arith.mulf %44, %44 : vector<8x256xf32>
    %46 = arith.mulf %44, %45 : vector<8x256xf32>
    %cst_23 = arith.constant 4.471500e-02 : f32
    %47 = vector.broadcast %cst_23 : f32 to vector<8x256xf32>
    %48 = arith.mulf %47, %46 : vector<8x256xf32>
    %49 = arith.addf %44, %48 : vector<8x256xf32>
    %cst_24 = arith.constant 0.797884583 : f32
    %50 = vector.broadcast %cst_24 : f32 to vector<8x256xf32>
    %51 = arith.mulf %50, %49 : vector<8x256xf32>
    %52 = math.tanh %51 : vector<8x256xf32>
    %cst_25 = arith.constant 1.000000e+00 : f32
    %53 = vector.broadcast %cst_25 : f32 to vector<8x256xf32>
    %54 = arith.addf %53, %52 : vector<8x256xf32>
    %cst_26 = arith.constant 5.000000e-01 : f32
    %55 = vector.broadcast %cst_26 : f32 to vector<8x256xf32>
    %56 = arith.mulf %55, %54 : vector<8x256xf32>
    %57 = arith.mulf %44, %56 : vector<8x256xf32>
    %c0_27 = arith.constant 0 : index
    %c0_28 = arith.constant 0 : index
    %58 = vector.load %arg8[%c0_27, %c0_28] : memref<1x256xf32, #tpu.memory_space<vmem>>, vector<1x256xf32>
    %59 = vector.broadcast %58 : vector<1x256xf32> to vector<8x256xf32>
    %60 = arith.mulf %57, %59 : vector<8x256xf32>
    %cst_29 = arith.constant dense<0.000000e+00> : vector<8xf32>
    %61 = vector.multi_reduction <add>, %60, %cst_29 [1] : vector<8x256xf32> to vector<8xf32>
    %62 = vector.shape_cast %61 : vector<8xf32> to vector<8x1xf32>
    %c0_30 = arith.constant 0 : index
    %c0_31 = arith.constant 0 : index
    %63 = vector.load %arg9[%c0_30, %c0_31] : memref<1x1xf32, #tpu.memory_space<vmem>>, vector<1x1xf32>
    %64 = vector.broadcast %63 : vector<1x1xf32> to vector<8x1xf32>
    %65 = arith.addf %62, %64 : vector<8x1xf32>
    %c0_32 = arith.constant 0 : index
    %c0_33 = arith.constant 0 : index
    %66 = vector.load %arg10[%c0_32, %c0_33] : memref<8x1xf32, #tpu.memory_space<vmem>>, vector<8x1xf32>
    tpu.vector_store %arg10[%c0_32, %c0_33], %65 {strides = array<i32>} : memref<8x1xf32, #tpu.memory_space<vmem>>, vector<8x1xf32>,
    return
  }
  func.func @transform_0(%arg0: i32) -> (i32, i32) {
    %c0_i32 = arith.constant 0 : i32
    %c0_i32_0 = arith.constant 0 : i32
    return %arg0, %c0_i32 : i32, i32
  }
  func.func @transform_1(%arg0: i32) -> (i32, i32) {
    %c0_i32 = arith.constant 0 : i32
    %c0_i32_0 = arith.constant 0 : i32
    %c0_i32_1 = arith.constant 0 : i32
    return %c0_i32, %c0_i32_0 : i32, i32
  }
  func.func @transform_2(%arg0: i32) -> (i32, i32) {
    %c0_i32 = arith.constant 0 : i32
    %c0_i32_0 = arith.constant 0 : i32
    %c0_i32_1 = arith.constant 0 : i32
    return %c0_i32, %c0_i32_0 : i32, i32
  }
  func.func @transform_3(%arg0: i32) -> (i32, i32) {
    %c0_i32 = arith.constant 0 : i32
    %c0_i32_0 = arith.constant 0 : i32
    %c0_i32_1 = arith.constant 0 : i32
    return %c0_i32, %c0_i32_0 : i32, i32
  }
  func.func @transform_4(%arg0: i32) -> (i32, i32) {
    %c0_i32 = arith.constant 0 : i32
    %c0_i32_0 = arith.constant 0 : i32
    %c0_i32_1 = arith.constant 0 : i32
    return %c0_i32, %c0_i32_0 : i32, i32
  }
  func.func @transform_5(%arg0: i32) -> (i32, i32) {
    %c0_i32 = arith.constant 0 : i32
    %c0_i32_0 = arith.constant 0 : i32
    %c0_i32_1 = arith.constant 0 : i32
    return %c0_i32, %c0_i32_0 : i32, i32
  }
  func.func @transform_6(%arg0: i32) -> (i32, i32) {
    %c0_i32 = arith.constant 0 : i32
    %c0_i32_0 = arith.constant 0 : i32
    %c0_i32_1 = arith.constant 0 : i32
    return %c0_i32, %c0_i32_0 : i32, i32
  }
  func.func @transform_7(%arg0: i32) -> (i32, i32) {
    %c0_i32 = arith.constant 0 : i32
    %c0_i32_0 = arith.constant 0 : i32
    %c0_i32_1 = arith.constant 0 : i32
    return %c0_i32, %c0_i32_0 : i32, i32
  }
  func.func @transform_8(%arg0: i32) -> (i32, i32) {
    %c0_i32 = arith.constant 0 : i32
    %c0_i32_0 = arith.constant 0 : i32
    %c0_i32_1 = arith.constant 0 : i32
    return %c0_i32, %c0_i32_0 : i32, i32
  }
  func.func @transform_9(%arg0: i32) -> (i32, i32) {
    %c0_i32 = arith.constant 0 : i32
    %c0_i32_0 = arith.constant 0 : i32
    return %arg0, %c0_i32 : i32, i32
  }
}

</mosaic_0001>

<llo_original>
// kernel: tpu_custom_call.1
$region0: #{tpu_custom_call.1}
  #allocation0 [shape = 'u32[]', space=smem, size = 0x4, offset = 0x4, fixed_abs, tag = 'smem constant byte address 0x4 - core index']
  #allocation1 [shape = 'u32[144,128]{1,0:T(1,128)}', space=vmem, size = 0x12000, scoped, tag = 'internal scratch']
  #allocation2 [shape = 'f32[1,1]{1,0:T(1,128)S(1)}', space=vmem, size = 0x200, scoped, tag = 'scoped memory for tpu_custom_call.1']
  %s0 = inlined_call_operand.vmem [shape: f32[2,8], index: 0, kind: input, shape index: {}]
  %s1 = inlined_call_operand.hbm [shape: bf16[8,256], index: 1, kind: input, shape index: {}]
  %s2 = inlined_call_operand.vmem [shape: f32[1,256], index: 2, kind: input, shape index: {}]
  %s3 = inlined_call_operand.hbm [shape: bf16[256,256], index: 3, kind: input, shape index: {}]
  %s4 = inlined_call_operand.vmem [shape: f32[1,256], index: 4, kind: input, shape index: {}]
  %s5 = inlined_call_operand.hbm [shape: bf16[256,256], index: 5, kind: input, shape index: {}]
  %s6 = inlined_call_operand.vmem [shape: f32[1,256], index: 6, kind: input, shape index: {}]
  %s7 = inlined_call_operand.vmem [shape: f32[1,256], index: 7, kind: input, shape index: {}]
  %s8 = inlined_call_operand.<no memory space> [shape: f32[1,1], index: 8, kind: input, shape index: {}]
  %s9 = inlined_call_operand.vmem [shape: f32[2,1], index: 9, kind: output, shape index: {}]
  %s10 = sld [smem:[#allocation0]]
  $region88: #{tpu_custom_call.1} parent=0
    _
  %s12 = ssub.s32 1, %s10
  %s13 = scalar_select 0, %s12, %s10
  %v14 = vstv %s8
  %15 = vst [vmem:[#allocation2] sm:$0x1] %v14
  $region1: #{tpu_custom_call.1} parent=0
    #allocation3 [shape = 'u8[4096]{0}', space=vmem, size = 0x1000, scoped, tag = 'input window, operand 1, single buffered']
    #allocation4 [shape = 's32[1]{0}', space=sflag, size = 0x4, scoped, tag = 'scoped memory for tpu_custom_call.1']
    #allocation5 [shape = 'u8[131072]{0}', space=vmem, size = 0x20000, scoped, tag = 'input window, operand 3, single buffered']
    #allocation6 [shape = 's32[1]{0}', space=sflag, size = 0x4, scoped, tag = 'scoped memory for tpu_custom_call.1']
    #allocation7 [shape = 'u8[131072]{0}', space=vmem, size = 0x20000, scoped, tag = 'input window, operand 5, single buffered']
    #allocation8 [shape = 'u8[4096]{0}', space=vmem, size = 0x1000, scoped, tag = 'output window, operand 0, single buffered']
    %16 = vsyncpa [#allocation4], 0
    %17 = vsyncpa [#allocation6], 0
    // Predicated region
    $region2: #{tpu_custom_call.1} parent=1 // pred_check
      _
    $region3: #{tpu_custom_call.1} parent=1 // pred_check_branch
      %19 = sbr.rel (0) target = $region5
    $region4: #{tpu_custom_call.1} parent=1 // pred_region
      _
    $region5: #{tpu_custom_call.1} parent=1 // pred_fallthru
      _
    // Predicated region
    $region6: #{tpu_custom_call.1} parent=1 // pred_check
      _
    $region7: #{tpu_custom_call.1} parent=1 // pred_check_branch
      %21 = sbr.rel (0) target = $region9
    $region8: #{tpu_custom_call.1} parent=1 // pred_region
      %s23 = ssub.s32 128, 128
      %24 = vsyncadd [#allocation4], %s23
      %s26 = sshll.u32 [#allocation3], 4
      %s27 = int_to_ptr.vmem [resolvable:$true] %s26
      %29 = dma.hbm_to_vmem [thread:$0]  %s1, 128, %s27, [#allocation4]
    $region9: #{tpu_custom_call.1} parent=1 // pred_fallthru
      _
    // Predicated region
    $region10: #{tpu_custom_call.1} parent=1 // pred_check
      _
    $region11: #{tpu_custom_call.1} parent=1 // pred_check_branch
      %31 = sbr.rel (0) target = $region13
    $region12: #{tpu_custom_call.1} parent=1 // pred_region
      _
    $region13: #{tpu_custom_call.1} parent=1 // pred_fallthru
      _
    // Predicated region
    $region14: #{tpu_custom_call.1} parent=1 // pred_check
      _
    $region15: #{tpu_custom_call.1} parent=1 // pred_check_branch
      %33 = sbr.rel (0) target = $region17
    $region16: #{tpu_custom_call.1} parent=1 // pred_region
      %s35 = ssub.s32 4096, 4096
      %36 = vsyncadd [#allocation6], %s35
      %s37 = sshll.u32 [#allocation5], 4
      %s38 = int_to_ptr.vmem [resolvable:$true] %s37
      %43 = dma.hbm_to_vmem [thread:$0]  %s3, 4096, %s38, [#allocation6], 128, 128, 8
    $region17: #{tpu_custom_call.1} parent=1 // pred_fallthru
      _
    // Predicated region
    $region18: #{tpu_custom_call.1} parent=1 // pred_check
      _
    $region19: #{tpu_custom_call.1} parent=1 // pred_check_branch
      %45 = sbr.rel (0) target = $region21
    $region20: #{tpu_custom_call.1} parent=1 // pred_region
      _
    $region21: #{tpu_custom_call.1} parent=1 // pred_fallthru
      _
    // Predicated region
    $region22: #{tpu_custom_call.1} parent=1 // pred_check
      _
    $region23: #{tpu_custom_call.1} parent=1 // pred_check_branch
      %47 = sbr.rel (0) target = $region25
    $region24: #{tpu_custom_call.1} parent=1 // pred_region
      %s49 = ssub.s32 4096, 4096
      %50 = vsyncadd [#allocation6], %s49
      %s51 = sshll.u32 [#allocation7], 4
      %s52 = int_to_ptr.vmem [resolvable:$true] %s51
      %57 = dma.hbm_to_vmem [thread:$0]  %s5, 4096, %s52, [#allocation6], 128, 128, 8
    $region25: #{tpu_custom_call.1} parent=1 // pred_fallthru
      _
    // Predicated region
    $region26: #{tpu_custom_call.1} parent=1 // pred_check
      _
    $region27: #{tpu_custom_call.1} parent=1 // pred_check_branch
      %59 = sbr.rel (0) target = $region29
    $region28: #{tpu_custom_call.1} parent=1 // pred_region
      _
    $region29: #{tpu_custom_call.1} parent=1 // pred_fallthru
      _
    // Predicated region
    $region30: #{tpu_custom_call.1} parent=1 // pred_check
      _
    $region31: #{tpu_custom_call.1} parent=1 // pred_check_branch
      %61 = sbr.rel (0) target = $region33
    $region32: #{tpu_custom_call.1} parent=1 // pred_region
      _
    $region33: #{tpu_custom_call.1} parent=1 // pred_fallthru
      _
    // Predicated region
    $region34: #{tpu_custom_call.1} parent=1 // pred_check
      _
    $region35: #{tpu_custom_call.1} parent=1 // pred_check_branch
      %63 = sbr.rel (0) target = $region37
    $region36: #{tpu_custom_call.1} parent=1 // pred_region
      _
    $region37: #{tpu_custom_call.1} parent=1 // pred_fallthru
      _
    // Predicated region
    $region38: #{tpu_custom_call.1} parent=1 // pred_check
      _
    $region39: #{tpu_custom_call.1} parent=1 // pred_check_branch
      %65 = sbr.rel (0) target = $region41
    $region40: #{tpu_custom_call.1} parent=1 // pred_region
      %66 = dma.done [#allocation4], 128
    $region41: #{tpu_custom_call.1} parent=1 // pred_fallthru
      _
    // Predicated region
    $region42: #{tpu_custom_call.1} parent=1 // pred_check
      _
    $region43: #{tpu_custom_call.1} parent=1 // pred_check_branch
      %68 = sbr.rel (0) target = $region45
    $region44: #{tpu_custom_call.1} parent=1 // pred_region
      %69 = dma.done [#allocation6], 4096
    $region45: #{tpu_custom_call.1} parent=1 // pred_fallthru
      _
    // Predicated region
    $region46: #{tpu_custom_call.1} parent=1 // pred_check
      _
    $region47: #{tpu_custom_call.1} parent=1 // pred_check_branch
      %71 = sbr.rel (0) target = $region49
    $region48: #{tpu_custom_call.1} parent=1 // pred_region
      %72 = dma.done [#allocation6], 4096
    $region49: #{tpu_custom_call.1} parent=1 // pred_fallthru
      _
    %v74 = vld [vmem:[%s0] sm:$0xff]
    %v75 = vpack.c.bf16 %v74, %v74
    %v76 = vld [vmem:[#allocation3] sm:$0xff]
    %v77 = vld [vmem:[%s2] sm:$0x3]
    %v79 = vlaneseq
    %v80 = vshrl.u32 %v79, 7
    %v81 = vsub.s32 0, %v80
    %v82 = vrot.slane %v77, %v81
    %v83 = vlaneseq
    %v84 = vshrl.u32 %v83, 7
    %v85 = vsub.s32 1, %v84
    %v86 = vrot.slane %v77, %v85
    %v90 = vunpack.c.l.b16 %v76
    %v91 = vunpack.c.h.b16 %v76
    %v92 = vpack.c.b16 %v90, %v90
    %v93 = vpack.c.b16 %v91, %v91
    %vm94 = vcmask 64512
    %v96 = vsel %vm94, %v75, 0
    %vm98 = vcmask 1043456
    %v100 = vsel %vm98, %v92, 0
    %v103 = vsel %vm98, %v93, 0
    %105 = vmatprep.subr.bf16.mxu0 %v103
    %106 = vmatpush1.bf16.msra.mxu0 %v100
    %107 = vmatprep.subr.bf16.mxu0 0
    %108 = vmatpush1.bf16.msra.mxu0 0
    %109 = vmatprep.subr.bf16.mxu0 0
    %110 = vmatpush1.bf16.msra.mxu0 0
    %111 = vmatprep.subr.bf16.mxu0 0
    %112 = vmatpush1.bf16.msra.mxu0 0
    %113 = vmatprep.subr.bf16.mxu0 0
    %114 = vmatpush1.bf16.msra.mxu0 0
    %115 = vmatprep.subr.bf16.mxu0 0
    %116 = vmatpush1.bf16.msra.mxu0 0
    %117 = vmatprep.subr.bf16.mxu0 0
    %118 = vmatpush1.bf16.msra.mxu0 0
    %119 = vmatprep.subr.bf16.mxu0 0
    %120 = vmatpush1.bf16.msra.mxu0 0
    %121 = vmatprep.subr.bf16.mxu0 0
    %122 = vmatpush1.bf16.msra.mxu0 0
    %123 = vmatprep.subr.bf16.mxu0 0
    %124 = vmatpush1.bf16.msra.mxu0 0
    %125 = vmatprep.subr.bf16.mxu0 0
    %126 = vmatpush1.bf16.msra.mxu0 0
    %127 = vmatprep.subr.bf16.mxu0 0
    %128 = vmatpush1.bf16.msra.mxu0 0
    %129 = vmatprep.subr.bf16.mxu0 0
    %130 = vmatpush1.bf16.msra.mxu0 0
    %131 = vmatprep.subr.bf16.mxu0 0
    %132 = vmatpush1.bf16.msra.mxu0 0
    %133 = vmatprep.subr.bf16.mxu0 0
    %134 = vmatpush1.bf16.msra.mxu0 0
    %135 = vmatprep.subr.bf16.mxu0 0
    %136 = vmatpush1.bf16.msra.mxu0 0
    %137 = vmatprep.mubr.bf16.mxu0 0
    %138 = vmatmul.mubr.bf16.gmra.mrb[0].mxu0 %v96
    %v139 = vpop.f32.mrb[0].mxu0
    %v140 = vadd.f32 %v82, %v139
    %v141 = vpop.f32.mrb[0].mxu0
    %v142 = vadd.f32 %v86, %v141
    %v143 = vpop.f32.mrb[0].mxu0
    %v144 = vpop.f32.mrb[0].mxu0
    %145 = vdwg.mxu0
    %v146 = vmul.f32 %v140, %v140
    %v147 = vmul.f32 %v142, %v142
    %v148 = vmul.f32 %v140, %v146
    %v149 = vmul.f32 %v142, %v147
    %v150 = vmul.f32 %v148, 0.044715
    %v151 = vmul.f32 %v149, 0.044715
    %v152 = vadd.f32 %v140, %v150
    %v153 = vadd.f32 %v142, %v151
    %v154 = vmul.f32 %v152, 0.7978846
    %v155 = vmul.f32 %v153, 0.7978846
    %v156 = vtanh.pop %v154
    %v157 = vtanh.pop %v155
    %v158 = vadd.f32 %v156, 1.0
    %v159 = vadd.f32 %v157, 1.0
    %v160 = vmul.f32 %v158, 0.5
    %v161 = vmul.f32 %v159, 0.5
    %v162 = vmul.f32 %v140, %v160
    %v163 = vmul.f32 %v142, %v161
    %v164 = vpack.c.bf16 %v162, %v162
    %v165 = vpack.c.bf16 %v163, %v163
    %v166 = vld [vmem:[#allocation5] sm:$0xff]
    %v167 = vld [vmem:[#allocation5 + $0x8] sm:$0xff]
    %v168 = vld [vmem:[#allocation5 + $0x10] sm:$0xff]
    %v169 = vld [vmem:[#allocation5 + $0x18] sm:$0xff]
    %v170 = vld [vmem:[#allocation5 + $0x20] sm:$0xff]
    %v171 = vld [vmem:[#allocation5 + $0x28] sm:$0xff]
    %v172 = vld [vmem:[#allocation5 + $0x30] sm:$0xff]
    %v173 = vld [vmem:[#allocation5 + $0x38] sm:$0xff]
    %v174 = vld [vmem:[#allocation5 + $0x40] sm:$0xff]
    %v175 = vld [vmem:[#allocation5 + $0x48] sm:$0xff]
    %v176 = vld [vmem:[#allocation5 + $0x50] sm:$0xff]
    %v177 = vld [vmem:[#allocation5 + $0x58] sm:$0xff]
    %v178 = vld [vmem:[#allocation5 + $0x60] sm:$0xff]
    %v179 = vld [vmem:[#allocation5 + $0x68] sm:$0xff]
    %v180 = vld [vmem:[#allocation5 + $0x70] sm:$0xff]
    %v181 = vld [vmem:[#allocation5 + $0x78] sm:$0xff]
    %v182 = vld [vmem:[#allocation5 + $0x80] sm:$0xff]
    %v183 = vld [vmem:[#allocation5 + $0x88] sm:$0xff]
    %v184 = vld [vmem:[#allocation5 + $0x90] sm:$0xff]
    %v185 = vld [vmem:[#allocation5 + $0x98] sm:$0xff]
    %v186 = vld [vmem:[#allocation5 + $0xa0] sm:$0xff]
    %v187 = vld [vmem:[#allocation5 + $0xa8] sm:$0xff]
    %v188 = vld [vmem:[#allocation5 + $0xb0] sm:$0xff]
    %v189 = vld [vmem:[#allocation5 + $0xb8] sm:$0xff]
    %v190 = vld [vmem:[#allocation5 + $0xc0] sm:$0xff]
    %v191 = vld [vmem:[#allocation5 + $0xc8] sm:$0xff]
    %v192 = vld [vmem:[#allocation5 + $0xd0] sm:$0xff]
    %v193 = vld [vmem:[#allocation5 + $0xd8] sm:$0xff]
    %v194 = vld [vmem:[#allocation5 + $0xe0] sm:$0xff]
    %v195 = vld [vmem:[#allocation5 + $0xe8] sm:$0xff]
    %v196 = vld [vmem:[#allocation5 + $0xf0] sm:$0xff]
    %v197 = vld [vmem:[#allocation5 + $0xf8] sm:$0xff]
    %v198 = vld [vmem:[%s4] sm:$0x3]
    %v200 = vlaneseq
    %v201 = vshrl.u32 %v200, 7
    %v202 = vsub.s32 0, %v201
    %v203 = vrot.slane %v198, %v202
    %v204 = vlaneseq
    %v205 = vshrl.u32 %v204, 7
    %v206 = vsub.s32 1, %v205
    %v207 = vrot.slane %v198, %v206
    %v242 = vunpack.c.l.b16 %v166
    %v243 = vunpack.c.h.b16 %v166
    %v244 = vunpack.c.l.b16 %v167
    %v245 = vunpack.c.h.b16 %v167
    %v246 = vunpack.c.l.b16 %v168
    %v247 = vunpack.c.h.b16 %v168
    %v248 = vunpack.c.l.b16 %v169
    %v249 = vunpack.c.h.b16 %v169
    %v250 = vunpack.c.l.b16 %v170
    %v251 = vunpack.c.h.b16 %v170
    %v252 = vunpack.c.l.b16 %v171
    %v253 = vunpack.c.h.b16 %v171
    %v254 = vunpack.c.l.b16 %v172
    %v255 = vunpack.c.h.b16 %v172
    %v256 = vunpack.c.l.b16 %v173
    %v257 = vunpack.c.h.b16 %v173
    %v258 = vunpack.c.l.b16 %v174
    %v259 = vunpack.c.h.b16 %v174
    %v260 = vunpack.c.l.b16 %v175
    %v261 = vunpack.c.h.b16 %v175
    %v262 = vunpack.c.l.b16 %v176
    %v263 = vunpack.c.h.b16 %v176
    %v264 = vunpack.c.l.b16 %v177
    %v265 = vunpack.c.h.b16 %v177
    %v266 = vunpack.c.l.b16 %v178
    %v267 = vunpack.c.h.b16 %v178
    %v268 = vunpack.c.l.b16 %v179
    %v269 = vunpack.c.h.b16 %v179
    %v270 = vunpack.c.l.b16 %v180
    %v271 = vunpack.c.h.b16 %v180
    %v272 = vunpack.c.l.b16 %v181
    %v273 = vunpack.c.h.b16 %v181
    %v274 = vunpack.c.l.b16 %v182
    %v275 = vunpack.c.h.b16 %v182
    %v276 = vunpack.c.l.b16 %v183
    %v277 = vunpack.c.h.b16 %v183
    %v278 = vunpack.c.l.b16 %v184
    %v279 = vunpack.c.h.b16 %v184
    %v280 = vunpack.c.l.b16 %v185
    %v281 = vunpack.c.h.b16 %v185
    %v282 = vunpack.c.l.b16 %v186
    %v283 = vunpack.c.h.b16 %v186
    %v284 = vunpack.c.l.b16 %v187
    %v285 = vunpack.c.h.b16 %v187
    %v286 = vunpack.c.l.b16 %v188
    %v287 = vunpack.c.h.b16 %v188
    %v288 = vunpack.c.l.b16 %v189
    %v289 = vunpack.c.h.b16 %v189
    %v290 = vunpack.c.l.b16 %v190
    %v291 = vunpack.c.h.b16 %v190
    %v292 = vunpack.c.l.b16 %v191
    %v293 = vunpack.c.h.b16 %v191
    %v294 = vunpack.c.l.b16 %v192
    %v295 = vunpack.c.h.b16 %v192
    %v296 = vunpack.c.l.b16 %v193
    %v297 = vunpack.c.h.b16 %v193
    %v298 = vunpack.c.l.b16 %v194
    %v299 = vunpack.c.h.b16 %v194
    %v300 = vunpack.c.l.b16 %v195
    %v301 = vunpack.c.h.b16 %v195
    %v302 = vunpack.c.l.b16 %v196
    %v303 = vunpack.c.h.b16 %v196
    %v304 = vunpack.c.l.b16 %v197
    %v305 = vunpack.c.h.b16 %v197
    %v306 = vpack.c.b16 %v244, %v242
    %v307 = vpack.c.b16 %v245, %v243
    %v308 = vpack.c.b16 %v248, %v246
    %v309 = vpack.c.b16 %v249, %v247
    %v310 = vpack.c.b16 %v252, %v250
    %v311 = vpack.c.b16 %v253, %v251
    %v312 = vpack.c.b16 %v256, %v254
    %v313 = vpack.c.b16 %v257, %v255
    %v314 = vpack.c.b16 %v260, %v258
    %v315 = vpack.c.b16 %v261, %v259
    %v316 = vpack.c.b16 %v264, %v262
    %v317 = vpack.c.b16 %v265, %v263
    %v318 = vpack.c.b16 %v268, %v266
    %v319 = vpack.c.b16 %v269, %v267
    %v320 = vpack.c.b16 %v272, %v270
    %v321 = vpack.c.b16 %v273, %v271
    %v322 = vpack.c.b16 %v276, %v274
    %v323 = vpack.c.b16 %v277, %v275
    %v324 = vpack.c.b16 %v280, %v278
    %v325 = vpack.c.b16 %v281, %v279
    %v326 = vpack.c.b16 %v284, %v282
    %v327 = vpack.c.b16 %v285, %v283
    %v328 = vpack.c.b16 %v288, %v286
    %v329 = vpack.c.b16 %v289, %v287
    %v330 = vpack.c.b16 %v292, %v290
    %v331 = vpack.c.b16 %v293, %v291
    %v332 = vpack.c.b16 %v296, %v294
    %v333 = vpack.c.b16 %v297, %v295
    %v334 = vpack.c.b16 %v300, %v298
    %v335 = vpack.c.b16 %v301, %v299
    %v336 = vpack.c.b16 %v304, %v302
    %v337 = vpack.c.b16 %v305, %v303
    %370 = vmatprep.subr.bf16.mxu0 %v307
    %371 = vmatpush1.bf16.msra.mxu0 %v306
    %372 = vmatprep.subr.bf16.mxu0 %v309
    %373 = vmatpush1.bf16.msra.mxu0 %v308
    %374 = vmatprep.subr.bf16.mxu0 %v311
    %375 = vmatpush1.bf16.msra.mxu0 %v310
    %376 = vmatprep.subr.bf16.mxu0 %v313
    %377 = vmatpush1.bf16.msra.mxu0 %v312
    %378 = vmatprep.subr.bf16.mxu0 %v315
    %379 = vmatpush1.bf16.msra.mxu0 %v314
    %380 = vmatprep.subr.bf16.mxu0 %v317
    %381 = vmatpush1.bf16.msra.mxu0 %v316
    %382 = vmatprep.subr.bf16.mxu0 %v319
    %383 = vmatpush1.bf16.msra.mxu0 %v318
    %384 = vmatprep.subr.bf16.mxu0 %v321
    %385 = vmatpush1.bf16.msra.mxu0 %v320
    %386 = vmatprep.subr.bf16.mxu0 %v323
    %387 = vmatpush1.bf16.msra.mxu0 %v322
    %388 = vmatprep.subr.bf16.mxu0 %v325
    %389 = vmatpush1.bf16.msra.mxu0 %v324
    %390 = vmatprep.subr.bf16.mxu0 %v327
    %391 = vmatpush1.bf16.msra.mxu0 %v326
    %392 = vmatprep.subr.bf16.mxu0 %v329
    %393 = vmatpush1.bf16.msra.mxu0 %v328
    %394 = vmatprep.subr.bf16.mxu0 %v331
    %395 = vmatpush1.bf16.msra.mxu0 %v330
    %396 = vmatprep.subr.bf16.mxu0 %v333
    %397 = vmatpush1.bf16.msra.mxu0 %v332
    %398 = vmatprep.subr.bf16.mxu0 %v335
    %399 = vmatpush1.bf16.msra.mxu0 %v334
    %400 = vmatprep.subr.bf16.mxu0 %v337
    %401 = vmatpush1.bf16.msra.mxu0 %v336
    %402 = vmatprep.mubr.bf16.mxu0 %v165
    %403 = vmatmul.mubr.bf16.gmra.mrb[0].mxu0 %v164
    %v404 = vpop.f32.mrb[0].mxu0
    %v405 = vadd.f32 %v203, %v404
    %v406 = vpop.f32.mrb[0].mxu0
    %v407 = vadd.f32 %v207, %v406
    %v408 = vpop.f32.mrb[0].mxu0
    %v409 = vpop.f32.mrb[0].mxu0
    %410 = vdwg.mxu0
    %v411 = vmul.f32 %v405, %v405
    %v412 = vmul.f32 %v407, %v407
    %v413 = vmul.f32 %v405, %v411
    %v414 = vmul.f32 %v407, %v412
    %v415 = vmul.f32 %v413, 0.044715
    %v416 = vmul.f32 %v414, 0.044715
    %v417 = vadd.f32 %v405, %v415
    %v418 = vadd.f32 %v407, %v416
    %v419 = vmul.f32 %v417, 0.7978846
    %v420 = vmul.f32 %v418, 0.7978846
    %v421 = vtanh.pop %v419
    %v422 = vtanh.pop %v420
    %v423 = vadd.f32 %v421, 1.0
    %v424 = vadd.f32 %v422, 1.0
    %v425 = vmul.f32 %v423, 0.5
    %v426 = vmul.f32 %v424, 0.5
    %v427 = vmul.f32 %v405, %v425
    %v428 = vmul.f32 %v407, %v426
    %v429 = vpack.c.bf16 %v427, %v427
    %v430 = vpack.c.bf16 %v428, %v428
    %v431 = vld [vmem:[#allocation7] sm:$0xff]
    %v432 = vld [vmem:[#allocation7 + $0x8] sm:$0xff]
    %v433 = vld [vmem:[#allocation7 + $0x10] sm:$0xff]
    %v434 = vld [vmem:[#allocation7 + $0x18] sm:$0xff]
    %v435 = vld [vmem:[#allocation7 + $0x20] sm:$0xff]
    %v436 = vld [vmem:[#allocation7 + $0x28] sm:$0xff]
    %v437 = vld [vmem:[#allocation7 + $0x30] sm:$0xff]
    %v438 = vld [vmem:[#allocation7 + $0x38] sm:$0xff]
    %v439 = vld [vmem:[#allocation7 + $0x40] sm:$0xff]
    %v440 = vld [vmem:[#allocation7 + $0x48] sm:$0xff]
    %v441 = vld [vmem:[#allocation7 + $0x50] sm:$0xff]
    %v442 = vld [vmem:[#allocation7 + $0x58] sm:$0xff]
    %v443 = vld [vmem:[#allocation7 + $0x60] sm:$0xff]
    %v444 = vld [vmem:[#allocation7 + $0x68] sm:$0xff]
    %v445 = vld [vmem:[#allocation7 + $0x70] sm:$0xff]
    %v446 = vld [vmem:[#allocation7 + $0x78] sm:$0xff]
    %v447 = vld [vmem:[#allocation7 + $0x80] sm:$0xff]
    %v448 = vld [vmem:[#allocation7 + $0x88] sm:$0xff]
    %v449 = vld [vmem:[#allocation7 + $0x90] sm:$0xff]
    %v450 = vld [vmem:[#allocation7 + $0x98] sm:$0xff]
    %v451 = vld [vmem:[#allocation7 + $0xa0] sm:$0xff]
    %v452 = vld [vmem:[#allocation7 + $0xa8] sm:$0xff]
    %v453 = vld [vmem:[#allocation7 + $0xb0] sm:$0xff]
    %v454 = vld [vmem:[#allocation7 + $0xb8] sm:$0xff]
    %v455 = vld [vmem:[#allocation7 + $0xc0] sm:$0xff]
    %v456 = vld [vmem:[#allocation7 + $0xc8] sm:$0xff]
    %v457 = vld [vmem:[#allocation7 + $0xd0] sm:$0xff]
    %v458 = vld [vmem:[#allocation7 + $0xd8] sm:$0xff]
    %v459 = vld [vmem:[#allocation7 + $0xe0] sm:$0xff]
    %v460 = vld [vmem:[#allocation7 + $0xe8] sm:$0xff]
    %v461 = vld [vmem:[#allocation7 + $0xf0] sm:$0xff]
    %v462 = vld [vmem:[#allocation7 + $0xf8] sm:$0xff]
    %v463 = vld [vmem:[%s6] sm:$0x3]
    %v465 = vlaneseq
    %v466 = vshrl.u32 %v465, 7
    %v467 = vsub.s32 0, %v466
    %v468 = vrot.slane %v463, %v467
    %v469 = vlaneseq
    %v470 = vshrl.u32 %v469, 7
    %v471 = vsub.s32 1, %v470
    %v472 = vrot.slane %v463, %v471
    %v507 = vunpack.c.l.b16 %v431
    %v508 = vunpack.c.h.b16 %v431
    %v509 = vunpack.c.l.b16 %v432
    %v510 = vunpack.c.h.b16 %v432
    %v511 = vunpack.c.l.b16 %v433
    %v512 = vunpack.c.h.b16 %v433
    %v513 = vunpack.c.l.b16 %v434
    %v514 = vunpack.c.h.b16 %v434
    %v515 = vunpack.c.l.b16 %v435
    %v516 = vunpack.c.h.b16 %v435
    %v517 = vunpack.c.l.b16 %v436
    %v518 = vunpack.c.h.b16 %v436
    %v519 = vunpack.c.l.b16 %v437
    %v520 = vunpack.c.h.b16 %v437
    %v521 = vunpack.c.l.b16 %v438
    %v522 = vunpack.c.h.b16 %v438
    %v523 = vunpack.c.l.b16 %v439
    %v524 = vunpack.c.h.b16 %v439
    %v525 = vunpack.c.l.b16 %v440
    %v526 = vunpack.c.h.b16 %v440
    %v527 = vunpack.c.l.b16 %v441
    %v528 = vunpack.c.h.b16 %v441
    %v529 = vunpack.c.l.b16 %v442
    %v530 = vunpack.c.h.b16 %v442
    %v531 = vunpack.c.l.b16 %v443
    %v532 = vunpack.c.h.b16 %v443
    %v533 = vunpack.c.l.b16 %v444
    %v534 = vunpack.c.h.b16 %v444
    %v535 = vunpack.c.l.b16 %v445
    %v536 = vunpack.c.h.b16 %v445
    %v537 = vunpack.c.l.b16 %v446
    %v538 = vunpack.c.h.b16 %v446
    %v539 = vunpack.c.l.b16 %v447
    %v540 = vunpack.c.h.b16 %v447
    %v541 = vunpack.c.l.b16 %v448
    %v542 = vunpack.c.h.b16 %v448
    %v543 = vunpack.c.l.b16 %v449
    %v544 = vunpack.c.h.b16 %v449
    %v545 = vunpack.c.l.b16 %v450
    %v546 = vunpack.c.h.b16 %v450
    %v547 = vunpack.c.l.b16 %v451
    %v548 = vunpack.c.h.b16 %v451
    %v549 = vunpack.c.l.b16 %v452
    %v550 = vunpack.c.h.b16 %v452
    %v551 = vunpack.c.l.b16 %v453
    %v552 = vunpack.c.h.b16 %v453
    %v553 = vunpack.c.l.b16 %v454
    %v554 = vunpack.c.h.b16 %v454
    %v555 = vunpack.c.l.b16 %v455
    %v556 = vunpack.c.h.b16 %v455
    %v557 = vunpack.c.l.b16 %v456
    %v558 = vunpack.c.h.b16 %v456
    %v559 = vunpack.c.l.b16 %v457
    %v560 = vunpack.c.h.b16 %v457
    %v561 = vunpack.c.l.b16 %v458
    %v562 = vunpack.c.h.b16 %v458
    %v563 = vunpack.c.l.b16 %v459
    %v564 = vunpack.c.h.b16 %v459
    %v565 = vunpack.c.l.b16 %v460
    %v566 = vunpack.c.h.b16 %v460
    %v567 = vunpack.c.l.b16 %v461
    %v568 = vunpack.c.h.b16 %v461
    %v569 = vunpack.c.l.b16 %v462
    %v570 = vunpack.c.h.b16 %v462
    %v571 = vpack.c.b16 %v509, %v507
    %v572 = vpack.c.b16 %v510, %v508
    %v573 = vpack.c.b16 %v513, %v511
    %v574 = vpack.c.b16 %v514, %v512
    %v575 = vpack.c.b16 %v517, %v515
    %v576 = vpack.c.b16 %v518, %v516
    %v577 = vpack.c.b16 %v521, %v519
    %v578 = vpack.c.b16 %v522, %v520
    %v579 = vpack.c.b16 %v525, %v523
    %v580 = vpack.c.b16 %v526, %v524
    %v581 = vpack.c.b16 %v529, %v527
    %v582 = vpack.c.b16 %v530, %v528
    %v583 = vpack.c.b16 %v533, %v531
    %v584 = vpack.c.b16 %v534, %v532
    %v585 = vpack.c.b16 %v537, %v535
    %v586 = vpack.c.b16 %v538, %v536
    %v587 = vpack.c.b16 %v541, %v539
    %v588 = vpack.c.b16 %v542, %v540
    %v589 = vpack.c.b16 %v545, %v543
    %v590 = vpack.c.b16 %v546, %v544
    %v591 = vpack.c.b16 %v549, %v547
    %v592 = vpack.c.b16 %v550, %v548
    %v593 = vpack.c.b16 %v553, %v551
    %v594 = vpack.c.b16 %v554, %v552
    %v595 = vpack.c.b16 %v557, %v555
    %v596 = vpack.c.b16 %v558, %v556
    %v597 = vpack.c.b16 %v561, %v559
    %v598 = vpack.c.b16 %v562, %v560
    %v599 = vpack.c.b16 %v565, %v563
    %v600 = vpack.c.b16 %v566, %v564
    %v601 = vpack.c.b16 %v569, %v567
    %v602 = vpack.c.b16 %v570, %v568
    %635 = vmatprep.subr.bf16.mxu0 %v572
    %636 = vmatpush1.bf16.msra.mxu0 %v571
    %637 = vmatprep.subr.bf16.mxu0 %v574
    %638 = vmatpush1.bf16.msra.mxu0 %v573
    %639 = vmatprep.subr.bf16.mxu0 %v576
    %640 = vmatpush1.bf16.msra.mxu0 %v575
    %641 = vmatprep.subr.bf16.mxu0 %v578
    %642 = vmatpush1.bf16.msra.mxu0 %v577
    %643 = vmatprep.subr.bf16.mxu0 %v580
    %644 = vmatpush1.bf16.msra.mxu0 %v579
    %645 = vmatprep.subr.bf16.mxu0 %v582
    %646 = vmatpush1.bf16.msra.mxu0 %v581
    %647 = vmatprep.subr.bf16.mxu0 %v584
    %648 = vmatpush1.bf16.msra.mxu0 %v583
    %649 = vmatprep.subr.bf16.mxu0 %v586
    %650 = vmatpush1.bf16.msra.mxu0 %v585
    %651 = vmatprep.subr.bf16.mxu0 %v588
    %652 = vmatpush1.bf16.msra.mxu0 %v587
    %653 = vmatprep.subr.bf16.mxu0 %v590
    %654 = vmatpush1.bf16.msra.mxu0 %v589
    %655 = vmatprep.subr.bf16.mxu0 %v592
    %656 = vmatpush1.bf16.msra.mxu0 %v591
    %657 = vmatprep.subr.bf16.mxu0 %v594
    %658 = vmatpush1.bf16.msra.mxu0 %v593
    %659 = vmatprep.subr.bf16.mxu0 %v596
    %660 = vmatpush1.bf16.msra.mxu0 %v595
    %661 = vmatprep.subr.bf16.mxu0 %v598
    %662 = vmatpush1.bf16.msra.mxu0 %v597
    %663 = vmatprep.subr.bf16.mxu0 %v600
    %664 = vmatpush1.bf16.msra.mxu0 %v599
    %665 = vmatprep.subr.bf16.mxu0 %v602
    %666 = vmatpush1.bf16.msra.mxu0 %v601
    %667 = vmatprep.mubr.bf16.mxu0 %v430
    %668 = vmatmul.mubr.bf16.gmra.mrb[0].mxu0 %v429
    %v669 = vpop.f32.mrb[0].mxu0
    %v670 = vadd.f32 %v468, %v669
    %v671 = vpop.f32.mrb[0].mxu0
    %v672 = vadd.f32 %v472, %v671
    %v673 = vpop.f32.mrb[0].mxu0
    %v674 = vpop.f32.mrb[0].mxu0
    %675 = vdwg.mxu0
    %v676 = vmul.f32 %v670, %v670
    %v677 = vmul.f32 %v672, %v672
    %v678 = vmul.f32 %v670, %v676
    %v679 = vmul.f32 %v672, %v677
    %v680 = vmul.f32 %v678, 0.044715
    %v681 = vmul.f32 %v679, 0.044715
    %v682 = vadd.f32 %v670, %v680
    %v683 = vadd.f32 %v672, %v681
    %v684 = vmul.f32 %v682, 0.7978846
    %v685 = vmul.f32 %v683, 0.7978846
    %v686 = vtanh.pop %v684
    %v687 = vtanh.pop %v685
    %v688 = vadd.f32 %v686, 1.0
    %v689 = vadd.f32 %v687, 1.0
    %v690 = vmul.f32 %v688, 0.5
    %v691 = vmul.f32 %v689, 0.5
    %v692 = vmul.f32 %v670, %v690
    %v693 = vmul.f32 %v672, %v691
    %v694 = vld [vmem:[%s7] sm:$0x3]
    %v696 = vlaneseq
    %v697 = vshrl.u32 %v696, 7
    %v698 = vsub.s32 0, %v697
    %v699 = vrot.slane %v694, %v698
    %v700 = vlaneseq
    %v701 = vshrl.u32 %v700, 7
    %v702 = vsub.s32 1, %v701
    %v703 = vrot.slane %v694, %v702
    %v706 = vmul.f32 %v692, %v699
    %v707 = vmul.f32 %v693, %v703
    %v708 = vadd.f32 %v706, %v707
    %709 = vadd.xlane.f32.xlu0 %v708
    %v710 = vpop.xlane.xlu0 %709
    %v711 = vld [vmem:[#allocation2] sm:$0x1]
    %v713 = vlaneseq
    %v714 = vshrl.u32 %v713, 7
    %v715 = vsub.s32 0, %v714
    %v716 = vrot.slane %v711, %v715
    %v718 = vadd.f32 %v710, %v716
    %vm719 = vcmask 7168
    %720 = vst.msk [vmem:[#allocation8] sm:$0xff] %vm719, %v718
    // Predicated region
    $region50: #{tpu_custom_call.1} parent=1 // pred_check
      _
    $region51: #{tpu_custom_call.1} parent=1 // pred_check_branch
      %722 = sbr.rel (0) target = $region53
    $region52: #{tpu_custom_call.1} parent=1 // pred_region
      // Predicated region
      $region54: #{tpu_custom_call.1} parent=52 // pred_check
        _
      $region55: #{tpu_custom_call.1} parent=52 // pred_check_branch
        %724 = sbr.rel (0) target = $region57
      $region56: #{tpu_custom_call.1} parent=52 // pred_region
        // Predicated region
        $region58: #{tpu_custom_call.1} parent=56 // pred_check
          _
        $region59: #{tpu_custom_call.1} parent=56 // pred_check_branch
          %726 = sbr.rel target = $region61
        $region60: #{tpu_custom_call.1} parent=56 // pred_region
          // Predicated region
          $region73: #{tpu_custom_call.1} parent=60 // pred_check
            _
          $region74: #{tpu_custom_call.1} parent=60 // pred_check_branch
            %741 = sbr.rel (0) target = $region76
          $region75: #{tpu_custom_call.1} parent=60 // pred_region
            loop: start=0, step=1, limit=1
            $region77: #{tpu_custom_call.1} parent=75 // loop_pre_header
              _
            $region78: #{tpu_custom_call.1} parent=75 // loop_header
              %s744 = sphi 0, %s748
              %p745 = scmp.ge.s32.totalorder %s744, 1
              %s749 = sphi [#allocation8], [#allocation8]
              %s750 = sphi %s9, %s9
            $region79: #{tpu_custom_call.1} parent=75 // loop_header_branch
              %747 = sbr.rel (%p745) target = $region83
            $region80: #{tpu_custom_call.1} parent=75 // loop_body
              %v751 = vld [vmem:[%s749] sm:$0x3]
              %752 = vst [vmem:[%s750] sm:$0x3] %v751
            $region81: #{tpu_custom_call.1} parent=75 // loop_footer
              %s748 = sadd.s32 1, %s744
            $region82: #{tpu_custom_call.1} parent=75 // loop_footer_branch
              %743 = sbr.rel target = $region78
            $region83: #{tpu_custom_call.1} parent=75 // loop_exit
              _
          $region76: #{tpu_custom_call.1} parent=60 // pred_fallthru
            _
        $region61: #{tpu_custom_call.1} parent=56 // pred_fallthru
          _
        // Predicated region
        $region62: #{tpu_custom_call.1} parent=56 // pred_check
          _
        $region63: #{tpu_custom_call.1} parent=56 // pred_check_branch
          %728 = sbr.rel (0) target = $region65
        $region64: #{tpu_custom_call.1} parent=56 // pred_region
          loop: start=0, step=1, limit=1
          $region66: #{tpu_custom_call.1} parent=64 // loop_pre_header
            _
          $region67: #{tpu_custom_call.1} parent=64 // loop_header
            %s731 = sphi 0, %s735
            %p732 = scmp.ge.s32.totalorder %s731, 1
            %s736 = sphi [#allocation8], [#allocation8]
            %s737 = sphi %s9, %s9
          $region68: #{tpu_custom_call.1} parent=64 // loop_header_branch
            %734 = sbr.rel (%p732) target = $region72
          $region69: #{tpu_custom_call.1} parent=64 // loop_body
            %v738 = vld [vmem:[%s736] sm:$0x3]
            %739 = vst [vmem:[%s737] sm:$0x3] %v738
          $region70: #{tpu_custom_call.1} parent=64 // loop_footer
            %s735 = sadd.s32 1, %s731
          $region71: #{tpu_custom_call.1} parent=64 // loop_footer_branch
            %730 = sbr.rel target = $region67
          $region72: #{tpu_custom_call.1} parent=64 // loop_exit
            _
        $region65: #{tpu_custom_call.1} parent=56 // pred_fallthru
          _
      $region57: #{tpu_custom_call.1} parent=52 // pred_fallthru
        _
      %753 = vnop
    $region53: #{tpu_custom_call.1} parent=1 // pred_fallthru
      _
    // Predicated region
    $region84: #{tpu_custom_call.1} parent=1 // pred_check
      _
    $region85: #{tpu_custom_call.1} parent=1 // pred_check_branch
      %755 = sbr.rel (0) target = $region87
    $region86: #{tpu_custom_call.1} parent=1 // pred_region
      _
    $region87: #{tpu_custom_call.1} parent=1 // pred_fallthru
      _
    %756 = vsyncpa [#allocation4], 1
    %757 = vsyncpa [#allocation6], 1

</llo_original>
